<compile_context>
chip_gen: v6e
topology: v6e:2x2x1
jax: 0.10.0
libtpu: 0.0.40
codegen_flags: <defaults>
</compile_context>

<pallas_src>
import jax
import jax.numpy as jnp
from jax.experimental import pallas as pl
from jax.experimental.pallas import tpu as pltpu

_LANES = 512                 # lane-dense slab width (multiple of 128)
_TILE_BYTES = 4 << 20        # target bytes per input tile (4 MiB)
_VMEM_LIMIT = 32 << 20       # in+out double-buffered 4 MiB tiles = 16 MiB;
                             # 32 MiB scoped budget is safe on v5e/v6e/v7x.


def _mish_kernel(x_ref, o_ref):
    x = x_ref[...]
    xf = x.astype(jnp.float32)
    # tanh(log(1 + e^x)) == (t^2 + 2t) / (t^2 + 2t + 2) with t = e^x.
    # Clamp x for the exp only: beyond 20 the ratio is 1.0 in f32, and the
    # clamp prevents e^{2x} overflow for large x.
    xc = jnp.minimum(xf, 20.0)
    t = jnp.exp(xc)
    num = t * (t + 2.0)
    den = num + 2.0
    # Exact reciprocal (approx=False keeps the 1e-5 tolerance); moves the
    # divide's refinement off the VALU critical slot on v7x / bf16 inputs.
    y = xf * (num * pl.reciprocal(den, approx=False))
    o_ref[...] = y.astype(o_ref.dtype)


def _compiler_params():
    return pltpu.CompilerParams(
        dimension_semantics=("parallel",),
        vmem_limit_bytes=_VMEM_LIMIT,
    )


def _cost(total, itemsize):
    return pl.CostEstimate(
        flops=8 * total,
        transcendentals=total,
        bytes_accessed=2 * total * itemsize,
    )


def mish(x):
    """Elementwise Mish via a tiled Pallas TPU kernel. Preserves shape/dtype."""
    orig_shape = x.shape
    dtype = x.dtype
    total = x.size
    itemsize = jnp.dtype(dtype).itemsize

    if total == 0:
        return x

    if total % _LANES == 0:
        # ---- Lane-dense 2-D slab path (no pad, no slice) ----
        rows = total // _LANES
        x2d = x.reshape(rows, _LANES)

        # dtype-scaled row tile: keep per-step DMA traffic ~constant in bytes
        # (2048 rows for f32, 4096 for bf16, ...).
        row_tile_max = max(8, _TILE_BYTES // (_LANES * itemsize))
        if rows < 16:
            tr = rows                              # single full block
        else:
            # At least two blocks so both v7x TensorCores get work; blocks are
            # sublane-aligned (multiple of 8 rows). Ragged last block is fine.
            half = (rows + 1) // 2
            tr = min(row_tile_max, ((half + 7) // 8) * 8)
        grid = (pl.cdiv(rows, tr),)

        out2d = pl.pallas_call(
            _mish_kernel,
            out_shape=jax.ShapeDtypeStruct((rows, _LANES), dtype),
            grid=grid,
            in_specs=[pl.BlockSpec((tr, _LANES), lambda i: (i, 0))],
            out_specs=pl.BlockSpec((tr, _LANES), lambda i: (i, 0)),
            compiler_params=_compiler_params(),
            cost_estimate=_cost(total, itemsize),
        )(x2d)
        return out2d.reshape(orig_shape)

    # ---- Ragged path: total not a multiple of the lane width ----
    # Run directly on the flat array with 1-D blocks. No jnp.pad of the input
    # and no output slice (each of those is a full extra HBM pass). Pallas
    # masks the ragged last block: OOB lanes feed garbage into exp but are
    # never stored and never reduced over.
    x1d = x.reshape(total)
    chunk = _TILE_BYTES // itemsize            # multiple of 1024 for all dtypes
    blk = total if total <= chunk else chunk   # small arrays: one full block
    grid = (pl.cdiv(total, blk),)

    out1d = pl.pallas_call(
        _mish_kernel,
        out_shape=jax.ShapeDtypeStruct((total,), dtype),
        grid=grid,
        in_specs=[pl.BlockSpec((blk,), lambda i: (i,))],
        out_specs=pl.BlockSpec((blk,), lambda i: (i,)),
        compiler_params=_compiler_params(),
        cost_estimate=_cost(total, itemsize),
    )(x1d)
    return out1d.reshape(orig_shape)


def _mish_ref(x):
    sp = jnp.maximum(x, 0.0) + jnp.log1p(jnp.exp(-jnp.abs(x)))
    return x * jnp.tanh(sp)


if __name__ == "__main__":
    key = jax.random.PRNGKey(0)
    x = jax.random.normal(key, (2, 4, 16, 16), dtype=jnp.float32)

    y = mish(x)
    jax.block_until_ready(y)

    assert y.shape == x.shape and y.dtype == x.dtype
    assert jnp.allclose(y, _mish_ref(x), atol=1e-5, rtol=1e-5)

    # Lane-unaligned path (total not a multiple of 512) + large-value guard.
    x_odd = jax.random.normal(jax.random.PRNGKey(1), (3, 5, 7), dtype=jnp.float32) * 30.0
    y_odd = mish(x_odd)
    jax.block_until_ready(y_odd)
    assert y_odd.shape == x_odd.shape and y_odd.dtype == x_odd.dtype
    assert jnp.allclose(y_odd, _mish_ref(x_odd), atol=1e-5, rtol=1e-5)
    assert jnp.all(jnp.isfinite(y_odd))

    # Larger aligned input: exercises the multi-block parallel grid path.
    x_big = jax.random.normal(jax.random.PRNGKey(2), (8, 32, 32, 32), dtype=jnp.float32)
    y_big = mish(x_big)
    jax.block_until_ready(y_big)
    assert jnp.allclose(y_big, _mish_ref(x_big), atol=1e-5, rtol=1e-5)

    print("KERNEL_OK")
</pallas_src>

<mosaic_0001>
module attributes {stable_mosaic.version = 11 : i64} {
  func.func @_mish_kernel(%arg0: i32, %arg1: memref<4x512xf32, #tpu.memory_space<vmem>>, %arg2: memref<4x512xf32, #tpu.memory_space<vmem>>) attributes {dimension_semantics = [#tpu.dimension_semantics<parallel>], iteration_bounds = array<i64: 1>, scalar_prefetch = 0 : i64, scratch_operands = 0 : i64, tpu.core_type = #tpu.core_type<tc>, window_params = [{transform_indices = @transform_0, window_bounds = array<i64: 4, 512>}, {transform_indices = @transform_1, window_bounds = array<i64: 4, 512>}]} {
    %c0 = arith.constant 0 : index
    %c0_0 = arith.constant 0 : index
    %0 = vector.load %arg1[%c0, %c0_0] : memref<4x512xf32, #tpu.memory_space<vmem>>, vector<4x512xf32>
    %cst = arith.constant 2.000000e+01 : f32
    %1 = vector.broadcast %cst : f32 to vector<4x512xf32>
    %2 = arith.minimumf %0, %1 : vector<4x512xf32>
    %3 = math.exp %2 : vector<4x512xf32>
    %cst_1 = arith.constant 2.000000e+00 : f32
    %4 = vector.broadcast %cst_1 : f32 to vector<4x512xf32>
    %5 = arith.addf %3, %4 : vector<4x512xf32>
    %6 = arith.mulf %3, %5 : vector<4x512xf32>
    %cst_2 = arith.constant 2.000000e+00 : f32
    %7 = vector.broadcast %cst_2 : f32 to vector<4x512xf32>
    %8 = arith.addf %6, %7 : vector<4x512xf32>
    %9 = tpu.reciprocal %8 : vector<4x512xf32> -> vector<4x512xf32>
    %10 = arith.mulf %6, %9 : vector<4x512xf32>
    %11 = arith.mulf %0, %10 : vector<4x512xf32>
    %c0_3 = arith.constant 0 : index
    %c0_4 = arith.constant 0 : index
    %12 = vector.load %arg2[%c0_3, %c0_4] : memref<4x512xf32, #tpu.memory_space<vmem>>, vector<4x512xf32>
    tpu.vector_store %arg2[%c0_3, %c0_4], %11 {strides = array<i32>} : memref<4x512xf32, #tpu.memory_space<vmem>>, vector<4x512xf32>,
    return
  }
  func.func @transform_0(%arg0: i32) -> (i32, i32) {
    %c0_i32 = arith.constant 0 : i32
    %c0_i32_0 = arith.constant 0 : i32
    return %arg0, %c0_i32 : i32, i32
  }
  func.func @transform_1(%arg0: i32) -> (i32, i32) {
    %c0_i32 = arith.constant 0 : i32
    %c0_i32_0 = arith.constant 0 : i32
    return %arg0, %c0_i32 : i32, i32
  }
}

</mosaic_0001>

<llo_original>
// kernel: tpu_custom_call.1
$region0: #{tpu_custom_call.1}
  #allocation0 [shape = 'u32[]', space=smem, size = 0x4, offset = 0x4, fixed_abs, tag = 'smem constant byte address 0x4 - core index']
  #allocation1 [shape = 'u32[144,128]{1,0:T(1,128)}', space=vmem, size = 0x12000, scoped, tag = 'internal scratch']
  %s0 = inlined_call_operand.hbm [shape: f32[4,512], index: 0, kind: input, shape index: {}]
  %s1 = inlined_call_operand.hbm [shape: f32[4,512], index: 1, kind: output, shape index: {}]
  %s2 = sld [smem:[#allocation0]]
  $region18: #{tpu_custom_call.1} parent=0
    _
  %s4 = ssub.s32 1, %s2
  %s5 = scalar_select 0, %s4, %s2
  $region1: #{tpu_custom_call.1} parent=0
    #allocation2 [shape = 'u8[8192]{0}', space=vmem, size = 0x2000, scoped, tag = 'input window, operand 0, single buffered']
    #allocation3 [shape = 's32[1]{0}', space=sflag, size = 0x4, scoped, tag = 'scoped memory for tpu_custom_call.1']
    #allocation4 [shape = 's32[1]{0}', space=sflag, size = 0x4, scoped, tag = 'scoped memory for tpu_custom_call.1']
    #allocation5 [shape = 'u8[8192]{0}', space=vmem, size = 0x2000, scoped, tag = 'output window, operand 0, single buffered']
    %6 = vsyncpa [#allocation3], 0
    %7 = vsyncpa [#allocation4], 0
    // Predicated region
    $region2: #{tpu_custom_call.1} parent=1 // pred_check
      _
    $region3: #{tpu_custom_call.1} parent=1 // pred_check_branch
      %9 = sbr.rel (0) target = $region5
    $region4: #{tpu_custom_call.1} parent=1 // pred_region
      %s11 = ssub.s32 256, 256
      %12 = vsyncadd [#allocation3], %s11
      %s14 = sshll.u32 [#allocation2], 4
      %s15 = int_to_ptr.vmem [resolvable:$true] %s14
      %17 = dma.hbm_to_vmem [thread:$0]  %s0, 256, %s15, [#allocation3]
    $region5: #{tpu_custom_call.1} parent=1 // pred_fallthru
      _
    // Predicated region
    $region6: #{tpu_custom_call.1} parent=1 // pred_check
      _
    $region7: #{tpu_custom_call.1} parent=1 // pred_check_branch
      %19 = sbr.rel (0) target = $region9
    $region8: #{tpu_custom_call.1} parent=1 // pred_region
      %20 = dma.done [#allocation3], 256
    $region9: #{tpu_custom_call.1} parent=1 // pred_fallthru
      _
    %v21 = vld [vmem:[#allocation2] sm:$0xff]
    %v22 = vld [vmem:[#allocation2 + $0x8] sm:$0xff]
    %v23 = vmin.f32 %v21, 20.0
    %v24 = vmin.f32 %v22, 20.0
    %v25 = vmul.f32 %v23, 1.442695
    %v26 = vpow.pop %v25
    %v27 = vmul.f32 %v24, 1.442695
    %v28 = vpow.pop %v27
    %v29 = vadd.f32 %v26, 2.0
    %v30 = vadd.f32 %v28, 2.0
    %v31 = vmul.f32 %v26, %v29
    %v32 = vmul.f32 %v28, %v30
    %v33 = vadd.f32 %v31, 2.0
    %v34 = vadd.f32 %v32, 2.0
    %v35 = vrcp.pop %v33
    %v36 = vrcp.pop %v34
    %v37 = vmul.f32 %v31, %v35
    %v38 = vmul.f32 %v32, %v36
    %v39 = vmul.f32 %v21, %v37
    %v40 = vmul.f32 %v22, %v38
    %41 = vst [vmem:[#allocation5] sm:$0xff] %v39
    %42 = vst [vmem:[#allocation5 + $0x8] sm:$0xff] %v40
    // Predicated region
    $region10: #{tpu_custom_call.1} parent=1 // pred_check
      _
    $region11: #{tpu_custom_call.1} parent=1 // pred_check_branch
      %44 = sbr.rel (0) target = $region13
    $region12: #{tpu_custom_call.1} parent=1 // pred_region
      %s46 = ssub.s32 256, 256
      %47 = vsyncadd [#allocation4], %s46
      %s49 = sshll.u32 [#allocation5], 4
      %s50 = int_to_ptr.vmem [resolvable:$true] %s49
      %52 = dma.vmem_to_hbm [thread:$0]  %s50, 256, %s1, [#allocation4]
    $region13: #{tpu_custom_call.1} parent=1 // pred_fallthru
      _
    // Predicated region
    $region14: #{tpu_custom_call.1} parent=1 // pred_check
      _
    $region15: #{tpu_custom_call.1} parent=1 // pred_check_branch
      %54 = sbr.rel (0) target = $region17
    $region16: #{tpu_custom_call.1} parent=1 // pred_region
      %55 = dma.done [#allocation4], 256
    $region17: #{tpu_custom_call.1} parent=1 // pred_fallthru
      _
    %56 = vsyncpa [#allocation3], 1
    %57 = vsyncpa [#allocation4], 1

</llo_original>
